<compile_context>
chip_gen: v6e
topology: v6e:2x2x1
jax: 0.10.0
libtpu: 0.0.40
codegen_flags: <defaults>
</compile_context>

<pallas_src>
import math

import jax
import jax.numpy as jnp
from jax.experimental import pallas as pl
from jax.experimental.pallas import tpu as pltpu


# ---------------------------------------------------------------------------
# VMEM budgeting (generation aware)
# ---------------------------------------------------------------------------
def _round_up(x, m):
    return -(-x // m) * m


def _vmem_budgets():
    """(fused_budget, fused_limit, tile_budget, tile_limit) in bytes."""
    try:
        vmem = int(pltpu.get_tpu_info().vmem_capacity_bytes)
    except Exception:
        vmem = 64 << 20
    if vmem >= (100 << 20):                      # v5e / v6e: 128 MiB per core
        return 96 << 20, 110 << 20, 24 << 20, 100 << 20
    # v7x (64 MiB per TensorCore) or unknown: stay conservative.
    return (min(40 << 20, (vmem * 5) // 8),
            min(56 << 20, (vmem * 7) // 8),
            min(14 << 20, (vmem * 2) // 9),
            min(28 << 20, (vmem * 4) // 9))


def _padded_tile_bytes(rows, cols, dtype):
    """VMEM bytes of one (rows, cols) tile, accounting for (sublane, lane) padding."""
    itemsize = jnp.dtype(dtype).itemsize
    sublane = 8 * max(1, 4 // itemsize)          # f32: 8, bf16: 16, int8/fp8: 32
    return _round_up(rows, sublane) * _round_up(cols, 128) * itemsize


def _fused_footprint(bn, c, hw, dtype, w_bytes):
    # in + out blocks, double-buffered, plus weight copies and f32-temp slack.
    return 4 * bn * _padded_tile_bytes(c, hw, dtype) + 4 * w_bytes + (1 << 20)


def _pick_bn(n, c, hw, dtype, budget, w_bytes):
    """Largest divisor of n fitting the budget, keeping >=2 grid steps when n>1."""
    cap = max(1, min(n // 2 if n > 1 else 1, 32))
    best = None
    for bn in range(1, cap + 1):
        if n % bn == 0 and _fused_footprint(bn, c, hw, dtype, w_bytes) <= budget:
            best = bn
    return best


def _pick_hw_tile(hw, c, dtype, budget):
    """Largest multiple-of-128 divisor of hw whose double-buffered blocks fit."""
    best = None
    for t in range(128, hw + 1, 128):
        if hw % t == 0 and 4 * _padded_tile_bytes(c, t, dtype) <= budget:
            best = t
    return best


# ---------------------------------------------------------------------------
# Fused single-pass kernel: Bn batch elements per grid step (NCHW-native).
# ---------------------------------------------------------------------------
def _se_fused_kernel(x_ref, w1_ref, w2_ref, o_ref):
    # x_ref / o_ref: (Bn, C, HW)  — HW on lanes, C on sublanes
    # w1_ref: (Cr, C)   fc1 weight (native PyTorch layout)
    # w2_ref: (C, Cr)   fc2 weight (native PyTorch layout)
    bn, _, hw = x_ref.shape
    inv_hw = 1.0 / hw
    w1 = w1_ref[...]
    w2 = w2_ref[...]
    ones = jnp.ones((hw, 1), x_ref.dtype)        # pool over lanes via the MXU
    for b in range(bn):                          # Bn is small & static (unrolled)
        x = x_ref[b]                                                        # (C, HW)
        pooled = jnp.dot(x, ones, preferred_element_type=jnp.float32) * inv_hw  # (C, 1)
        h = jnp.maximum(jnp.dot(w1, pooled,
                                preferred_element_type=jnp.float32), 0.0)       # (Cr, 1)
        s = jax.nn.sigmoid(jnp.dot(w2, h,
                                   preferred_element_type=jnp.float32))         # (C, 1)
        o_ref[b] = x * s.astype(x.dtype)          # lane-broadcast per-channel scale


# ---------------------------------------------------------------------------
# Large-slab fallback: one pallas_call with a phase axis, grid = (N, 2, n_t).
# Phase 0: accumulate pooled sum over HW tiles, compute sigmoid scale (scratch).
# Phase 1: re-stream the tiles and apply the scale.
# ---------------------------------------------------------------------------
def _make_twopass_kernel(inv_hw):
    def kernel(x_ref, w1_ref, w2_ref, o_ref, acc_ref, s_ref):
        # x_ref / o_ref: (C, hw_tile); acc_ref / s_ref: (C, 1) f32 scratch.
        p = pl.program_id(1)
        t = pl.program_id(2)
        last_t = pl.num_programs(2) - 1

        @pl.when((p == 0) & (t == 0))
        def _():
            acc_ref[...] = jnp.zeros_like(acc_ref)

        @pl.when(p == 0)
        def _():
            x = x_ref[...]
            ones = jnp.ones((x.shape[1], 1), x.dtype)
            acc_ref[...] += jnp.dot(x, ones, preferred_element_type=jnp.float32)

        @pl.when((p == 0) & (t == last_t))
        def _():
            pooled = acc_ref[...] * inv_hw                                       # (C, 1)
            h = jnp.maximum(jnp.dot(w1_ref[...], pooled,
                                    preferred_element_type=jnp.float32), 0.0)    # (Cr, 1)
            s_ref[...] = jax.nn.sigmoid(jnp.dot(w2_ref[...], h,
                                                preferred_element_type=jnp.float32))

        @pl.when(p == 1)
        def _():
            o_ref[...] = x_ref[...] * s_ref[...].astype(o_ref.dtype)

    return kernel


# ---------------------------------------------------------------------------
# Wrappers
# ---------------------------------------------------------------------------
def se_module_flat(x_flat, w1, w2, *, force_two_pass=False, hw_tile=None):
    """SE forward on NCHW-native flattened data. x_flat: (N, C, HW), w1: (Cr, C), w2: (C, Cr)."""
    N, C, HW = x_flat.shape
    Cr = w1.shape[0]
    dtype = x_flat.dtype

    fused_budget, fused_limit, tile_budget, tile_limit = _vmem_budgets()

    w1 = jnp.asarray(w1, jnp.float32)
    w2 = jnp.asarray(w2, jnp.float32)
    w_bytes = (_padded_tile_bytes(Cr, C, jnp.float32) +
               _padded_tile_bytes(C, Cr, jnp.float32))

    bn = None if force_two_pass else _pick_bn(N, C, HW, dtype, fused_budget, w_bytes)

    if bn is not None:
        return pl.pallas_call(
            _se_fused_kernel,
            out_shape=jax.ShapeDtypeStruct((N, C, HW), dtype),
            grid_spec=pltpu.PrefetchScalarGridSpec(
                num_scalar_prefetch=0,
                grid=(N // bn,),
                in_specs=[
                    pl.BlockSpec((bn, C, HW), lambda n: (n, 0, 0)),
                    pl.BlockSpec((Cr, C), lambda n: (0, 0)),
                    pl.BlockSpec((C, Cr), lambda n: (0, 0)),
                ],
                out_specs=pl.BlockSpec((bn, C, HW), lambda n: (n, 0, 0)),
            ),
            compiler_params=pltpu.CompilerParams(
                dimension_semantics=("parallel",),
                vmem_limit_bytes=fused_limit),
        )(x_flat, w1, w2)

    # ---------------- two-pass (phase-grid) fallback -----------------------
    x_p = x_flat
    HW_p = HW
    if hw_tile is None:
        hw_tile = _pick_hw_tile(HW, C, dtype, tile_budget)
        if hw_tile is None:
            # No multiple-of-128 divisor: zero-pad HW (zeros don't change the
            # sum; the mean uses the true HW) instead of one oversized block.
            HW_p = _round_up(HW, 128)
            x_p = jnp.pad(x_flat, ((0, 0), (0, 0), (0, HW_p - HW)))
            hw_tile = _pick_hw_tile(HW_p, C, dtype, tile_budget) or 128
    else:
        assert HW % hw_tile == 0 and (hw_tile % 128 == 0 or hw_tile == HW), (
            "hw_tile must divide HW and be a multiple of 128 (or equal HW)")
    n_t = HW_p // hw_tile

    out = pl.pallas_call(
        _make_twopass_kernel(1.0 / HW),
        out_shape=jax.ShapeDtypeStruct((N, C, HW_p), dtype),
        grid_spec=pltpu.PrefetchScalarGridSpec(
            num_scalar_prefetch=0,
            grid=(N, 2, n_t),
            in_specs=[
                pl.BlockSpec((None, C, hw_tile), lambda n, p, t: (n, 0, t)),
                pl.BlockSpec((Cr, C), lambda n, p, t: (0, 0)),
                pl.BlockSpec((C, Cr), lambda n, p, t: (0, 0)),
            ],
            # Phase 0 parks the (unwritten) output block at tile 0; phase 1
            # writes tile t before the block index ever advances, so only
            # correct data is written back.
            out_specs=pl.BlockSpec((None, C, hw_tile), lambda n, p, t: (n, 0, p * t)),
            scratch_shapes=[pltpu.VMEM((C, 1), jnp.float32),   # pooled-sum acc
                            pltpu.VMEM((C, 1), jnp.float32)],  # sigmoid scale
        ),
        compiler_params=pltpu.CompilerParams(
            dimension_semantics=("parallel", "arbitrary", "arbitrary"),
            vmem_limit_bytes=tile_limit),
    )(x_p, w1, w2)

    if HW_p != HW:
        out = out[:, :, :HW]
    return out


def se_module(x_nchw, w1, w2, *, force_two_pass=False, hw_tile=None):
    """SEModule forward with the PyTorch NCHW interface (no transposes, reshape only)."""
    N, C, H, W = x_nchw.shape
    out = se_module_flat(x_nchw.reshape(N, C, H * W), w1, w2,
                         force_two_pass=force_two_pass, hw_tile=hw_tile)
    return out.reshape(N, C, H, W)


def init_se_params(key, channels, reduction):
    """Deterministic parameter init matching SEModule.__init__ shapes.

    fc1: Conv2d(C, C//r, 1, bias=False), xavier_uniform  -> stored as (Cr, C)
    fc2: Conv2d(C//r, C, 1, bias=False), PyTorch default -> stored as (C, Cr)
    """
    cr = channels // reduction
    k1, k2 = jax.random.split(key)

    xavier_bound = math.sqrt(6.0 / (channels + cr))
    w1 = jax.random.uniform(k1, (cr, channels), jnp.float32,
                            minval=-xavier_bound, maxval=xavier_bound)

    default_bound = 1.0 / math.sqrt(cr)
    w2 = jax.random.uniform(k2, (channels, cr), jnp.float32,
                            minval=-default_bound, maxval=default_bound)
    return w1, w2


def se_module_ref(x, w1, w2):
    """Pure-JAX reference for correctness checks."""
    pooled = jnp.mean(x.astype(jnp.float32), axis=(2, 3))   # (N, C)
    h = jnp.maximum(pooled @ w1.T, 0.0)                     # (N, Cr)
    s = jax.nn.sigmoid(h @ w2.T)                            # (N, C)
    return x * s[:, :, None, None].astype(x.dtype)


if __name__ == "__main__":
    key = jax.random.PRNGKey(0)
    kx, kp, kx2 = jax.random.split(key, 3)

    # Case 1: small SE block (HW = 256, multiple of 128) -> fused NCHW-native path.
    N, C, H, W = 2, 4, 16, 16
    reduction = 2
    x = jax.random.normal(kx, (N, C, H, W), jnp.float32)
    w1, w2 = init_se_params(kp, C, reduction)
    ref = se_module_ref(x, w1, w2)

    out = jax.block_until_ready(se_module(x, w1, w2))
    assert out.shape == (N, C, H, W)
    assert jnp.allclose(out, ref, atol=1e-5, rtol=1e-5), "fused path mismatch"

    # Case 2: forced two-pass (phase-grid) path with two 128-wide HW tiles.
    out2 = jax.block_until_ready(
        se_module(x, w1, w2, force_two_pass=True, hw_tile=128))
    assert jnp.allclose(out2, ref, atol=1e-5, rtol=1e-5), "two-pass path mismatch"

    # Case 3: HW not a multiple of 128 (10x10) and odd batch.
    N3, C3, H3, W3 = 3, 8, 10, 10
    x3 = jax.random.normal(kx2, (N3, C3, H3, W3), jnp.float32)
    w1b, w2b = init_se_params(kp, C3, 2)
    ref3 = se_module_ref(x3, w1b, w2b)

    out3 = jax.block_until_ready(se_module(x3, w1b, w2b))
    assert jnp.allclose(out3, ref3, atol=1e-5, rtol=1e-5), "fused (ragged HW) mismatch"

    # Forced two-pass on the ragged-HW shape exercises the HW zero-padding path.
    out4 = jax.block_until_ready(se_module(x3, w1b, w2b, force_two_pass=True))
    assert jnp.allclose(out4, ref3, atol=1e-5, rtol=1e-5), "two-pass (padded HW) mismatch"

    print("KERNEL_OK")
</pallas_src>

<mosaic_0001>
module attributes {stable_mosaic.version = 11 : i64} {
  func.func @_se_fused_kernel(%arg0: i32, %arg1: memref<1x4x256xf32, #tpu.memory_space<vmem>>, %arg2: memref<2x4xf32, #tpu.memory_space<vmem>>, %arg3: memref<4x2xf32, #tpu.memory_space<vmem>>, %arg4: memref<1x4x256xf32, #tpu.memory_space<vmem>>) attributes {dimension_semantics = [#tpu.dimension_semantics<parallel>], iteration_bounds = array<i64: 2>, scalar_prefetch = 0 : i64, scratch_operands = 0 : i64, tpu.core_type = #tpu.core_type<tc>, window_params = [{transform_indices = @transform_0, window_bounds = array<i64: 1, 4, 256>}, {pipeline_mode = #tpu.pipeline_mode<synchronous>, transform_indices = @transform_1, window_bounds = array<i64: 2, 4>}, {pipeline_mode = #tpu.pipeline_mode<synchronous>, transform_indices = @transform_2, window_bounds = array<i64: 4, 2>}, {transform_indices = @transform_3, window_bounds = array<i64: 1, 4, 256>}]} {
    %c0 = arith.constant 0 : index
    %c0_0 = arith.constant 0 : index
    %0 = vector.load %arg2[%c0, %c0_0] : memref<2x4xf32, #tpu.memory_space<vmem>>, vector<2x4xf32>
    %c0_1 = arith.constant 0 : index
    %c0_2 = arith.constant 0 : index
    %1 = vector.load %arg3[%c0_1, %c0_2] : memref<4x2xf32, #tpu.memory_space<vmem>>, vector<4x2xf32>
    %cst = arith.constant 1.000000e+00 : f32
    %2 = vector.broadcast %cst : f32 to vector<256x1xf32>
    %c0_3 = arith.constant 0 : index
    %c0_4 = arith.constant 0 : index
    %c0_5 = arith.constant 0 : index
    %3 = vector.load %arg1[%c0_3, %c0_4, %c0_5] : memref<1x4x256xf32, #tpu.memory_space<vmem>>, vector<1x4x256xf32>
    %4 = vector.shape_cast %3 : vector<1x4x256xf32> to vector<4x256xf32>
    %cst_6 = arith.constant dense<0.000000e+00> : vector<4x1xf32>
    %5 = tpu.matmul %4, %2, %cst_6 {dimension_numbers = #tpu.dot_dimension_numbers<[1], [0], [0], [1], [0, 0, 1, 1], [], []>} : vector<4x256xf32>, vector<256x1xf32>, vector<4x1xf32> -> vector<4x1xf32>
    %cst_7 = arith.constant 3.906250e-03 : f32
    %6 = vector.broadcast %cst_7 : f32 to vector<4x1xf32>
    %7 = arith.mulf %5, %6 : vector<4x1xf32>
    %cst_8 = arith.constant dense<0.000000e+00> : vector<2x1xf32>
    %8 = tpu.matmul %0, %7, %cst_8 {dimension_numbers = #tpu.dot_dimension_numbers<[1], [0], [0], [1], [0, 0, 1, 1], [], []>} : vector<2x4xf32>, vector<4x1xf32>, vector<2x1xf32> -> vector<2x1xf32>
    %cst_9 = arith.constant 0.000000e+00 : f32
    %9 = vector.broadcast %cst_9 : f32 to vector<2x1xf32>
    %10 = arith.maximumf %8, %9 : vector<2x1xf32>
    %cst_10 = arith.constant dense<0.000000e+00> : vector<4x1xf32>
    %11 = tpu.matmul %1, %10, %cst_10 {dimension_numbers = #tpu.dot_dimension_numbers<[1], [0], [0], [1], [0, 0, 1, 1], [], []>} : vector<4x2xf32>, vector<2x1xf32>, vector<4x1xf32> -> vector<4x1xf32>
    %12 = arith.negf %11 : vector<4x1xf32>
    %13 = math.exp %12 : vector<4x1xf32>
    %cst_11 = arith.constant 1.000000e+00 : f32
    %14 = vector.broadcast %cst_11 : f32 to vector<4x1xf32>
    %15 = arith.addf %14, %13 : vector<4x1xf32>
    %16 = arith.divf %14, %15 : vector<4x1xf32>
    %17 = vector.broadcast %16 : vector<4x1xf32> to vector<4x256xf32>
    %18 = arith.mulf %4, %17 : vector<4x256xf32>
    %c0_12 = arith.constant 0 : index
    %c0_13 = arith.constant 0 : index
    %c0_14 = arith.constant 0 : index
    %19 = vector.load %arg4[%c0_12, %c0_13, %c0_14] : memref<1x4x256xf32, #tpu.memory_space<vmem>>, vector<1x4x256xf32>
    %20 = vector.shape_cast %19 : vector<1x4x256xf32> to vector<4x256xf32>
    %21 = vector.shape_cast %18 : vector<4x256xf32> to vector<1x4x256xf32>
    tpu.vector_store %arg4[%c0_12, %c0_13, %c0_14], %21 {strides = array<i32>} : memref<1x4x256xf32, #tpu.memory_space<vmem>>, vector<1x4x256xf32>,
    return
  }
  func.func @transform_0(%arg0: i32) -> (i32, i32, i32) {
    %c0_i32 = arith.constant 0 : i32
    %c0_i32_0 = arith.constant 0 : i32
    %c0_i32_1 = arith.constant 0 : i32
    return %arg0, %c0_i32, %c0_i32_0 : i32, i32, i32
  }
  func.func @transform_1(%arg0: i32) -> (i32, i32) {
    %c0_i32 = arith.constant 0 : i32
    %c0_i32_0 = arith.constant 0 : i32
    %c0_i32_1 = arith.constant 0 : i32
    return %c0_i32, %c0_i32_0 : i32, i32
  }
  func.func @transform_2(%arg0: i32) -> (i32, i32) {
    %c0_i32 = arith.constant 0 : i32
    %c0_i32_0 = arith.constant 0 : i32
    %c0_i32_1 = arith.constant 0 : i32
    return %c0_i32, %c0_i32_0 : i32, i32
  }
  func.func @transform_3(%arg0: i32) -> (i32, i32, i32) {
    %c0_i32 = arith.constant 0 : i32
    %c0_i32_0 = arith.constant 0 : i32
    %c0_i32_1 = arith.constant 0 : i32
    return %arg0, %c0_i32, %c0_i32_0 : i32, i32, i32
  }
}

</mosaic_0001>

<llo_original>
// kernel: tpu_custom_call.1
$region0: #{tpu_custom_call.1}
  #allocation0 [shape = 'u32[]', space=smem, size = 0x4, offset = 0x4, fixed_abs, tag = 'smem constant byte address 0x4 - core index']
  #allocation1 [shape = 'u32[144,128]{1,0:T(1,128)}', space=vmem, size = 0x12000, scoped, tag = 'internal scratch']
  %s0 = inlined_call_operand.hbm [shape: f32[2,4,256], index: 0, kind: input, shape index: {}]
  %s1 = inlined_call_operand.vmem [shape: f32[2,4], index: 1, kind: input, shape index: {}]
  %s2 = inlined_call_operand.vmem [shape: f32[4,2], index: 2, kind: input, shape index: {}]
  %s3 = inlined_call_operand.hbm [shape: f32[2,4,256], index: 3, kind: output, shape index: {}]
  %s4 = sld [smem:[#allocation0]]
  $region49: #{tpu_custom_call.1} parent=0
    _
  %s6 = ssub.s32 1, %s4
  %s7 = scalar_select 0, %s6, %s4
  $region1: #{tpu_custom_call.1} parent=0
    #allocation2 [shape = 'u8[8192]{0}', space=vmem, size = 0x2000, scoped, tag = 'input window, operand 0']
    #allocation3 [shape = 's32[2]{0}', space=sflag, size = 0x8, scoped, tag = 'scoped memory for tpu_custom_call.1']
    #allocation4 [shape = 's32[2]{0}', space=sflag, size = 0x8, scoped, tag = 'scoped memory for tpu_custom_call.1']
    #allocation5 [shape = 'u8[8192]{0}', space=vmem, size = 0x2000, scoped, tag = 'output window, operand 0']
    %8 = vsyncpa [#allocation3], 0
    %s9 = scalar_lea.sflag [#allocation3], 1
    %10 = vsyncpa %s9, 0
    %11 = vsyncpa [#allocation4], 0
    %s12 = scalar_lea.sflag [#allocation4], 1
    %13 = vsyncpa %s12, 0
    loop: start=0, step=1, limit=4
    $region2: #{tpu_custom_call.1} parent=1 // loop_pre_header
      _
    $region3: #{tpu_custom_call.1} parent=1 // loop_header
      %s15 = sphi 0, %s19
      %p16 = scmp.ge.s32.totalorder %s15, 4
      %s25 = sphi 0, %s27
      %s28 = sphi 0, %s25
      %s29 = sphi 0, %s28
      %s45 = sphi 0, %s29
      %s49 = sphi 0, %s49
      %s51 = sphi 0, %s49
      %s52 = sphi 0, %s51
      %s66 = sphi 0, %s52
      %s70 = sphi 0, %s70
      %s72 = sphi 0, %s70
      %s73 = sphi 0, %s72
      %s87 = sphi 0, %s73
      %s93 = sphi 0, %s95
      %s96 = sphi 0, %s93
      %s97 = sphi 0, %s96
      %s113 = sphi 0, %s97
    $region4: #{tpu_custom_call.1} parent=1 // loop_header_branch
      %18 = sbr.rel (%p16) target = $region8
    $region5: #{tpu_custom_call.1} parent=1 // loop_body
      %s20 = ssub.s32 %s15, 1
      %s21 = ssub.s32 %s15, 2
      %s22 = sadd.s32 %s15, 1
      %s23 = ssub.s32 %s15, %s22
      %p24 = scmp.eq.s32.totalorder %s23, 0
      %s26 = sadd.s32 %s25, 1
      %s27 = scalar_select %p24, %s25, %s26
      %p30 = pneg %p24
      %p31 = scmp.eq.s32.totalorder %s15, 1
      %p32 = por %p30, %p31
      %p33 = scmp.ne.s32.totalorder %s25, %s28
      %p34 = scmp.eq.s32.totalorder %s15, 0
      %p35 = por %p33, %p34
      %p36 = scmp.ne.s32.totalorder %s25, %s28
      %p37 = scmp.eq.s32.totalorder %s20, 1
      %p38 = por %p36, %p37
      %p39 = scmp.ne.s32.totalorder %s28, %s29
      %p40 = scmp.eq.s32.totalorder %s20, 0
      %p41 = por %p39, %p40
      %p42 = scmp.ne.s32.totalorder %s28, %s29
      %p43 = scmp.eq.s32.totalorder %s21, 1
      %p44 = por %p42, %p43
      %p46 = scmp.ne.s32.totalorder %s29, %s45
      %p47 = scmp.eq.s32.totalorder %s21, 0
      %p48 = por %p46, %p47
      %s50 = sadd.s32 %s49, 1
      %p53 = scmp.eq.s32.totalorder %s15, 1
      %p54 = scmp.ne.s32.totalorder %s49, %s51
      %p55 = scmp.eq.s32.totalorder %s15, 0
      %p56 = por %p54, %p55
      %p57 = scmp.ne.s32.totalorder %s49, %s51
      %p58 = scmp.eq.s32.totalorder %s20, 1
      %p59 = por %p57, %p58
      %p60 = scmp.ne.s32.totalorder %s51, %s52
      %p61 = scmp.eq.s32.totalorder %s20, 0
      %p62 = por %p60, %p61
      %p63 = scmp.ne.s32.totalorder %s51, %s52
      %p64 = scmp.eq.s32.totalorder %s21, 1
      %p65 = por %p63, %p64
      %p67 = scmp.ne.s32.totalorder %s52, %s66
      %p68 = scmp.eq.s32.totalorder %s21, 0
      %p69 = por %p67, %p68
      %s71 = sadd.s32 %s70, 1
      %p74 = scmp.eq.s32.totalorder %s15, 1
      %p75 = scmp.ne.s32.totalorder %s70, %s72
      %p76 = scmp.eq.s32.totalorder %s15, 0
      %p77 = por %p75, %p76
      %p78 = scmp.ne.s32.totalorder %s70, %s72
      %p79 = scmp.eq.s32.totalorder %s20, 1
      %p80 = por %p78, %p79
      %p81 = scmp.ne.s32.totalorder %s72, %s73
      %p82 = scmp.eq.s32.totalorder %s20, 0
      %p83 = por %p81, %p82
      %p84 = scmp.ne.s32.totalorder %s72, %s73
      %p85 = scmp.eq.s32.totalorder %s21, 1
      %p86 = por %p84, %p85
      %p88 = scmp.ne.s32.totalorder %s73, %s87
      %p89 = scmp.eq.s32.totalorder %s21, 0
      %p90 = por %p88, %p89
      %s91 = ssub.s32 %s15, %s22
      %p92 = scmp.eq.s32.totalorder %s91, 0
      %s94 = sadd.s32 %s93, 1
      %s95 = scalar_select %p92, %s93, %s94
      %p98 = pneg %p92
      %p99 = scmp.eq.s32.totalorder %s15, 1
      %p100 = por %p98, %p99
      %p101 = scmp.ne.s32.totalorder %s93, %s96
      %p102 = scmp.eq.s32.totalorder %s15, 0
      %p103 = por %p101, %p102
      %p104 = scmp.ne.s32.totalorder %s93, %s96
      %p105 = scmp.eq.s32.totalorder %s20, 1
      %p106 = por %p104, %p105
      %p107 = scmp.ne.s32.totalorder %s96, %s97
      %p108 = scmp.eq.s32.totalorder %s20, 0
      %p109 = por %p107, %p108
      %p110 = scmp.ne.s32.totalorder %s96, %s97
      %p111 = scmp.eq.s32.totalorder %s21, 1
      %p112 = por %p110, %p111
      %p114 = scmp.ne.s32.totalorder %s97, %s113
      %p115 = scmp.eq.s32.totalorder %s21, 0
      %p116 = por %p114, %p115
      %p117 = scmp.le.s32.totalorder 1, %s15
      %p118 = scmp.lt.s32.totalorder %s15, 3
      %p119 = pnand %p117, %p118
      %p120 = pneg %p119
      // Predicated region
      $region9: #{tpu_custom_call.1} parent=5 // pred_check
        _
      $region10: #{tpu_custom_call.1} parent=5 // pred_check_branch
        %122 = sbr.rel (%p119) target = $region12
      $region11: #{tpu_custom_call.1} parent=5 // pred_region
        %s123 = ssub.s32 %s15, 1
        // Predicated region
        $region13: #{tpu_custom_call.1} parent=11 // pred_check
          %p124 = pneg %p62
        $region14: #{tpu_custom_call.1} parent=11 // pred_check_branch
          %126 = sbr.rel (%p124) target = $region16
        $region15: #{tpu_custom_call.1} parent=11 // pred_region
          _
        $region16: #{tpu_custom_call.1} parent=11 // pred_fallthru
          _
        // Predicated region
        $region17: #{tpu_custom_call.1} parent=11 // pred_check
          %p127 = pneg %p83
        $region18: #{tpu_custom_call.1} parent=11 // pred_check_branch
          %129 = sbr.rel (%p127) target = $region20
        $region19: #{tpu_custom_call.1} parent=11 // pred_region
          _
        $region20: #{tpu_custom_call.1} parent=11 // pred_fallthru
          _
      $region12: #{tpu_custom_call.1} parent=5 // pred_fallthru
        _
      %p130 = scmp.lt.s32.totalorder %s15, 2
      // Predicated region
      $region21: #{tpu_custom_call.1} parent=5 // pred_check
        %p131 = pneg %p130
      $region22: #{tpu_custom_call.1} parent=5 // pred_check_branch
        %133 = sbr.rel (%p131) target = $region24
      $region23: #{tpu_custom_call.1} parent=5 // pred_region
        // Predicated region
        $region25: #{tpu_custom_call.1} parent=23 // pred_check
          %p134 = pneg %p35
        $region26: #{tpu_custom_call.1} parent=23 // pred_check_branch
          %136 = sbr.rel (%p134) target = $region28
        $region27: #{tpu_custom_call.1} parent=23 // pred_region
          %s137 = sand.u32 %s25, 1
          %s138 = scalar_lea.sflag [#allocation3], %s137
          %s139 = sand.u32 %s25, 1
          %s140 = smul.addr %s139, 8
          %s141 = scalar_lea.vmem [#allocation2], %s140
          %s143 = ssub.s32 128, 128
          %144 = vsyncadd %s138, %s143
          %s145 = smul.addr %s15, 2
          %s146 = smul.addr %s145, 64
          %s147 = scalar_lea.hbm %s0, %s146
          %s149 = sshll.u32 %s141, 4
          %s150 = int_to_ptr.vmem [resolvable:$true] %s149
          %152 = dma.hbm_to_vmem [thread:$0]  %s147, 128, %s150, %s138
        $region28: #{tpu_custom_call.1} parent=23 // pred_fallthru
          _
      $region24: #{tpu_custom_call.1} parent=5 // pred_fallthru
        _
      %p153 = scmp.le.s32.totalorder 1, %s15
      %p154 = scmp.lt.s32.totalorder %s15, 3
      %p155 = pnand %p153, %p154
      %p156 = pneg %p155
      // Predicated region
      $region29: #{tpu_custom_call.1} parent=5 // pred_check
        _
      $region30: #{tpu_custom_call.1} parent=5 // pred_check_branch
        %158 = sbr.rel (%p155) target = $region32
      $region31: #{tpu_custom_call.1} parent=5 // pred_region
        %s159 = ssub.s32 %s15, 1
        %s160 = sand.u32 %s28, 1
        %s161 = scalar_lea.sflag [#allocation3], %s160
        %s162 = sand.u32 %s28, 1
        %s163 = smul.addr %s162, 8
        %s164 = scalar_lea.vmem [#allocation2], %s163
        // Predicated region
        $region33: #{tpu_custom_call.1} parent=31 // pred_check
          %p165 = pneg %p41
        $region34: #{tpu_custom_call.1} parent=31 // pred_check_branch
          %167 = sbr.rel (%p165) target = $region36
        $region35: #{tpu_custom_call.1} parent=31 // pred_region
          %168 = dma.done %s161, 128
        $region36: #{tpu_custom_call.1} parent=31 // pred_fallthru
          _
        %s169 = sand.u32 %s28, 1
        %s170 = scalar_lea.sflag [#allocation3], %s169
        %s171 = sand.u32 %s28, 1
        %s172 = smul.addr %s171, 8
        %s173 = scalar_lea.vmem [#allocation2], %s172
        %p174 = pneg %p41
        %p175 = pneg %p38
        %p176 = pneg %p62
        %p177 = pneg %p59
        %p178 = pneg %p83
        %p179 = pneg %p80
        %p180 = pneg %p109
        %p181 = pneg %p106
        %s182 = sand.u32 %s96, 1
        %s183 = scalar_lea.sflag [#allocation4], %s182
        %s184 = sand.u32 %s96, 1
        %s185 = smul.addr %s184, 8
        %s186 = scalar_lea.vmem [#allocation5], %s185
        %v187 = vld [vmem:[%s1] sm:$0x3]
        %v188 = vld [vmem:[%s2] sm:$0xf]
        %v189 = vld [vmem:[%s164] sm:$0xff]
        %v191 = vcombine.high %v189, %v189
        %193 = vmatprep.subr.mxu0 0.0
        %194 = vmatpush1.msra.mxu0 1.0
        %195 = vmatprep.subr.mxu0 0.0
        %196 = vmatpush1.msra.mxu0 1.0
        %197 = vmatprep.subr.mxu0 0.0
        %198 = vmatpush1.msra.mxu0 1.0
        %199 = vmatprep.subr.mxu0 0.0
        %200 = vmatpush1.msra.mxu0 1.0
        %201 = vmatprep.subr.mxu0 0.0
        %202 = vmatpush1.msra.mxu0 1.0
        %203 = vmatprep.subr.mxu0 0.0
        %204 = vmatpush1.msra.mxu0 1.0
        %205 = vmatprep.subr.mxu0 0.0
        %206 = vmatpush1.msra.mxu0 1.0
        %207 = vmatprep.subr.mxu0 0.0
        %208 = vmatpush1.msra.mxu0 1.0
        %209 = vmatprep.subr.mxu0 0.0
        %210 = vmatpush1.msra.mxu0 1.0
        %211 = vmatprep.subr.mxu0 0.0
        %212 = vmatpush1.msra.mxu0 1.0
        %213 = vmatprep.subr.mxu0 0.0
        %214 = vmatpush1.msra.mxu0 1.0
        %215 = vmatprep.subr.mxu0 0.0
        %216 = vmatpush1.msra.mxu0 1.0
        %217 = vmatprep.subr.mxu0 0.0
        %218 = vmatpush1.msra.mxu0 1.0
        %219 = vmatprep.subr.mxu0 0.0
        %220 = vmatpush1.msra.mxu0 1.0
        %221 = vmatprep.subr.mxu0 0.0
        %222 = vmatpush1.msra.mxu0 1.0
        %223 = vmatprep.subr.mxu0 0.0
        %224 = vmatpush1.msra.mxu0 1.0
        %225 = vmatprep.subr.mxu0 0.0
        %226 = vmatpush2.msra.mxu0 1.0
        %227 = vmatprep.subr.mxu0 0.0
        %228 = vmatpush2.msra.mxu0 1.0
        %229 = vmatprep.subr.mxu0 0.0
        %230 = vmatpush2.msra.mxu0 1.0
        %231 = vmatprep.subr.mxu0 0.0
        %232 = vmatpush2.msra.mxu0 1.0
        %233 = vmatprep.subr.mxu0 0.0
        %234 = vmatpush2.msra.mxu0 1.0
        %235 = vmatprep.subr.mxu0 0.0
        %236 = vmatpush2.msra.mxu0 1.0
        %237 = vmatprep.subr.mxu0 0.0
        %238 = vmatpush2.msra.mxu0 1.0
        %239 = vmatprep.subr.mxu0 0.0
        %240 = vmatpush2.msra.mxu0 1.0
        %241 = vmatprep.subr.mxu0 0.0
        %242 = vmatpush2.msra.mxu0 1.0
        %243 = vmatprep.subr.mxu0 0.0
        %244 = vmatpush2.msra.mxu0 1.0
        %245 = vmatprep.subr.mxu0 0.0
        %246 = vmatpush2.msra.mxu0 1.0
        %247 = vmatprep.subr.mxu0 0.0
        %248 = vmatpush2.msra.mxu0 1.0
        %249 = vmatprep.subr.mxu0 0.0
        %250 = vmatpush2.msra.mxu0 1.0
        %251 = vmatprep.subr.mxu0 0.0
        %252 = vmatpush2.msra.mxu0 1.0
        %253 = vmatprep.subr.mxu0 0.0
        %254 = vmatpush2.msra.mxu0 1.0
        %255 = vmatprep.subr.mxu0 0.0
        %256 = vmatpush2.msra.mxu0 1.0
        %257 = vmatprep.mubr.f32.mxu0 %v191
        %258 = vmatmul.mubr.f32.gmra.mxu0 %v189
        %v259 = vpop.f32.mrf.mxu0
        %v260 = vadd.f32 0.0, %v259
        %v261 = vpop.f32.mrf.mxu0
        %262 = vdwg.mxu0
        %v263 = vmul.f32 %v260, 0.00390625
        %vm264 = vcmask 31744
        %v266 = vsel %vm264, %v187, 0
        %vm268 = vcmask 1043456
        %v270 = vsel %vm268, %v263, 0
        %272 = vmatprep.subr.mxu0 0.0
        %273 = vmatpush1.msra.mxu0 0.0
        %274 = vmatprep.subr.mxu0 0.0
        %275 = vmatpush1.msra.mxu0 0.0
        %276 = vmatprep.subr.mxu0 0.0
        %277 = vmatpush1.msra.mxu0 0.0
        %278 = vmatprep.subr.mxu0 0.0
        %279 = vmatpush1.msra.mxu0 0.0
        %280 = vmatprep.subr.mxu0 0.0
        %281 = vmatpush1.msra.mxu0 0.0
        %282 = vmatprep.subr.mxu0 0.0
        %283 = vmatpush1.msra.mxu0 0.0
        %284 = vmatprep.subr.mxu0 0.0
        %285 = vmatpush1.msra.mxu0 0.0
        %286 = vmatprep.subr.mxu0 0.0
        %287 = vmatpush1.msra.mxu0 0.0
        %288 = vmatprep.subr.mxu0 0.0
        %289 = vmatpush1.msra.mxu0 0.0
        %290 = vmatprep.subr.mxu0 0.0
        %291 = vmatpush1.msra.mxu0 0.0
        %292 = vmatprep.subr.mxu0 0.0
        %293 = vmatpush1.msra.mxu0 0.0
        %294 = vmatprep.subr.mxu0 0.0
        %295 = vmatpush1.msra.mxu0 0.0
        %296 = vmatprep.subr.mxu0 0.0
        %297 = vmatpush1.msra.mxu0 0.0
        %298 = vmatprep.subr.mxu0 0.0
        %299 = vmatpush1.msra.mxu0 0.0
        %300 = vmatprep.subr.mxu0 0.0
        %301 = vmatpush1.msra.mxu0 0.0
        %302 = vmatprep.subr.mxu0 0.0
        %303 = vmatpush1.msra.mxu0 %v270
        %304 = vmatprep.subr.mxu0 0.0
        %305 = vmatpush2.msra.mxu0 0.0
        %306 = vmatprep.subr.mxu0 0.0
        %307 = vmatpush2.msra.mxu0 0.0
        %308 = vmatprep.subr.mxu0 0.0
        %309 = vmatpush2.msra.mxu0 0.0
        %310 = vmatprep.subr.mxu0 0.0
        %311 = vmatpush2.msra.mxu0 0.0
        %312 = vmatprep.subr.mxu0 0.0
        %313 = vmatpush2.msra.mxu0 0.0
        %314 = vmatprep.subr.mxu0 0.0
        %315 = vmatpush2.msra.mxu0 0.0
        %316 = vmatprep.subr.mxu0 0.0
        %317 = vmatpush2.msra.mxu0 0.0
        %318 = vmatprep.subr.mxu0 0.0
        %319 = vmatpush2.msra.mxu0 0.0
        %320 = vmatprep.subr.mxu0 0.0
        %321 = vmatpush2.msra.mxu0 0.0
        %322 = vmatprep.subr.mxu0 0.0
        %323 = vmatpush2.msra.mxu0 0.0
        %324 = vmatprep.subr.mxu0 0.0
        %325 = vmatpush2.msra.mxu0 0.0
        %326 = vmatprep.subr.mxu0 0.0
        %327 = vmatpush2.msra.mxu0 0.0
        %328 = vmatprep.subr.mxu0 0.0
        %329 = vmatpush2.msra.mxu0 0.0
        %330 = vmatprep.subr.mxu0 0.0
        %331 = vmatpush2.msra.mxu0 0.0
        %332 = vmatprep.subr.mxu0 0.0
        %333 = vmatpush2.msra.mxu0 0.0
        %334 = vmatprep.subr.mxu0 0.0
        %335 = vmatpush2.msra.mxu0 0.0
        %336 = vmatprep.mubr.f32.mxu0 0.0
        %337 = vmatmul.mubr.f32.gmra.mxu0 %v266
        %v338 = vpop.f32.mrf.mxu0
        %v339 = vadd.f32 0.0, %v338
        %v340 = vpop.f32.mrf.mxu0
        %341 = vdwg.mxu0
        %v342 = vmax.f32 %v339, 0.0
        %vm343 = vcmask 15360
        %v345 = vsel %vm343, %v188, 0
        %vm347 = vcmask 1041408
        %v349 = vsel %vm347, %v342, 0
        %351 = vmatprep.subr.mxu0 0.0
        %352 = vmatpush1.msra.mxu0 0.0
        %353 = vmatprep.subr.mxu0 0.0
        %354 = vmatpush1.msra.mxu0 0.0
        %355 = vmatprep.subr.mxu0 0.0
        %356 = vmatpush1.msra.mxu0 0.0
        %357 = vmatprep.subr.mxu0 0.0
        %358 = vmatpush1.msra.mxu0 0.0
        %359 = vmatprep.subr.mxu0 0.0
        %360 = vmatpush1.msra.mxu0 0.0
        %361 = vmatprep.subr.mxu0 0.0
        %362 = vmatpush1.msra.mxu0 0.0
        %363 = vmatprep.subr.mxu0 0.0
        %364 = vmatpush1.msra.mxu0 0.0
        %365 = vmatprep.subr.mxu0 0.0
        %366 = vmatpush1.msra.mxu0 0.0
        %367 = vmatprep.subr.mxu0 0.0
        %368 = vmatpush1.msra.mxu0 0.0
        %369 = vmatprep.subr.mxu0 0.0
        %370 = vmatpush1.msra.mxu0 0.0
        %371 = vmatprep.subr.mxu0 0.0
        %372 = vmatpush1.msra.mxu0 0.0
        %373 = vmatprep.subr.mxu0 0.0
        %374 = vmatpush1.msra.mxu0 0.0
        %375 = vmatprep.subr.mxu0 0.0
        %376 = vmatpush1.msra.mxu0 0.0
        %377 = vmatprep.subr.mxu0 0.0
        %378 = vmatpush1.msra.mxu0 0.0
        %379 = vmatprep.subr.mxu0 0.0
        %380 = vmatpush1.msra.mxu0 0.0
        %381 = vmatprep.subr.mxu0 0.0
        %382 = vmatpush1.msra.mxu0 %v349
        %383 = vmatprep.subr.mxu0 0.0
        %384 = vmatpush2.msra.mxu0 0.0
        %385 = vmatprep.subr.mxu0 0.0
        %386 = vmatpush2.msra.mxu0 0.0
        %387 = vmatprep.subr.mxu0 0.0
        %388 = vmatpush2.msra.mxu0 0.0
        %389 = vmatprep.subr.mxu0 0.0
        %390 = vmatpush2.msra.mxu0 0.0
        %391 = vmatprep.subr.mxu0 0.0
        %392 = vmatpush2.msra.mxu0 0.0
        %393 = vmatprep.subr.mxu0 0.0
        %394 = vmatpush2.msra.mxu0 0.0
        %395 = vmatprep.subr.mxu0 0.0
        %396 = vmatpush2.msra.mxu0 0.0
        %397 = vmatprep.subr.mxu0 0.0
        %398 = vmatpush2.msra.mxu0 0.0
        %399 = vmatprep.subr.mxu0 0.0
        %400 = vmatpush2.msra.mxu0 0.0
        %401 = vmatprep.subr.mxu0 0.0
        %402 = vmatpush2.msra.mxu0 0.0
        %403 = vmatprep.subr.mxu0 0.0
        %404 = vmatpush2.msra.mxu0 0.0
        %405 = vmatprep.subr.mxu0 0.0
        %406 = vmatpush2.msra.mxu0 0.0
        %407 = vmatprep.subr.mxu0 0.0
        %408 = vmatpush2.msra.mxu0 0.0
        %409 = vmatprep.subr.mxu0 0.0
        %410 = vmatpush2.msra.mxu0 0.0
        %411 = vmatprep.subr.mxu0 0.0
        %412 = vmatpush2.msra.mxu0 0.0
        %413 = vmatprep.subr.mxu0 0.0
        %414 = vmatpush2.msra.mxu0 0.0
        %415 = vmatprep.mubr.f32.mxu0 0.0
        %416 = vmatmul.mubr.f32.gmra.mxu0 %v345
        %v417 = vpop.f32.mrf.mxu0
        %v418 = vadd.f32 0.0, %v417
        %v419 = vpop.f32.mrf.mxu0
        %420 = vdwg.mxu0
        %v421 = vxor.u32 %v418, 2147483648
        %v422 = vmul.f32 %v421, 1.442695
        %v423 = vpow.pop %v422
        %v424 = vadd.f32 %v423, 1.0
        %v425 = vrcp.pop %v424
        %v426 = vmul.f32 1.0, %v425
        %428 = vset.pattern.permute.xlu0 0
        %429 = vperm.xlu0 %428, %v426
        %v430 = vpop.permute.xlu0 %429
        %v432 = vunpack.c.l.s4 839922192
        %v433 = vunpack.c.0.s8 %v432
        %v434 = vlaneseq
        %v435 = vshrl.u32 %v434, 7
        %v436 = vsub.s32 %v433, %v435
        %v437 = vrot.slane %v430, %v436
        %v439 = vmul.f32 %v189, %v437
        %440 = vst [vmem:[%s186] sm:$0xff] %v439
        %s441 = sand.u32 %s96, 1
        %s442 = scalar_lea.sflag [#allocation4], %s441
        %s443 = sand.u32 %s96, 1
        %s444 = smul.addr %s443, 8
        %s445 = scalar_lea.vmem [#allocation5], %s444
        // Predicated region
        $region37: #{tpu_custom_call.1} parent=31 // pred_check
          %p446 = pneg %p106
        $region38: #{tpu_custom_call.1} parent=31 // pred_check_branch
          %448 = sbr.rel (%p446) target = $region40
        $region39: #{tpu_custom_call.1} parent=31 // pred_region
          %s450 = ssub.s32 128, 128
          %451 = vsyncadd %s442, %s450
          %s452 = smul.addr %s20, 2
          %s453 = smul.addr %s452, 64
          %s454 = scalar_lea.hbm %s3, %s453
          %s456 = sshll.u32 %s445, 4
          %s457 = int_to_ptr.vmem [resolvable:$true] %s456
          %459 = dma.vmem_to_hbm [thread:$0]  %s457, 128, %s454, %s442
        $region40: #{tpu_custom_call.1} parent=31 // pred_fallthru
          _
      $region32: #{tpu_custom_call.1} parent=5 // pred_fallthru
        _
      %p460 = scmp.le.s32.totalorder 2, %s15
      // Predicated region
      $region41: #{tpu_custom_call.1} parent=5 // pred_check
        %p461 = pneg %p460
      $region42: #{tpu_custom_call.1} parent=5 // pred_check_branch
        %463 = sbr.rel (%p461) target = $region44
      $region43: #{tpu_custom_call.1} parent=5 // pred_region
        %s464 = ssub.s32 %s15, 2
        // Predicated region
        $region45: #{tpu_custom_call.1} parent=43 // pred_check
          %p465 = pneg %p112
        $region46: #{tpu_custom_call.1} parent=43 // pred_check_branch
          %467 = sbr.rel (%p465) target = $region48
        $region47: #{tpu_custom_call.1} parent=43 // pred_region
          %s468 = sand.u32 %s97, 1
          %s469 = scalar_lea.sflag [#allocation4], %s468
          %s470 = sand.u32 %s97, 1
          %s471 = smul.addr %s470, 8
          %s472 = scalar_lea.vmem [#allocation5], %s471
          %473 = dma.done %s469, 128
        $region48: #{tpu_custom_call.1} parent=43 // pred_fallthru
          _
      $region44: #{tpu_custom_call.1} parent=5 // pred_fallthru
        _
    $region6: #{tpu_custom_call.1} parent=1 // loop_footer
      %s19 = sadd.s32 1, %s15
    $region7: #{tpu_custom_call.1} parent=1 // loop_footer_branch
      %14 = sbr.rel target = $region3
    $region8: #{tpu_custom_call.1} parent=1 // loop_exit
      _
    %474 = vsyncpa [#allocation3], 1
    %s475 = scalar_lea.sflag [#allocation3], 1
    %476 = vsyncpa %s475, 1
    %477 = vsyncpa [#allocation4], 1
    %s478 = scalar_lea.sflag [#allocation4], 1
    %479 = vsyncpa %s478, 1

</llo_original>
